<compile_context>
chip_gen: v6e
topology: v6e:2x2x1
jax: 0.10.0
libtpu: 0.0.40
codegen_flags: <defaults>
</compile_context>

<pallas_src>
import math
from functools import partial

import jax
import jax.numpy as jnp
from jax.experimental import pallas as pl
from jax.experimental.pallas import tpu as pltpu


# ----------------------------- planning helpers -----------------------------------

def _round_up(x, m):
    return (x + m - 1) // m * m


def _cdiv(a, b):
    return (a + b - 1) // b


def _device_kind():
    try:
        return jax.devices()[0].device_kind.lower()
    except Exception:
        return ""


def _vmem_cap_bytes():
    """Physical VMEM per TensorCore, with a conservative fallback."""
    try:
        return int(pltpu.get_tpu_info().vmem_capacity_bytes)
    except Exception:
        kind = _device_kind()
        # v7x has 64 MiB / TC; v5e / v6e have 128 MiB.
        return (64 if "7" in kind else 128) * 1024 * 1024


def _num_tensorcores():
    # v7x exposes 2 TensorCores per chip; v5e / v6e are single-TC.
    return 2 if "7" in _device_kind() else 1


def _prefer_256():
    # v6e / v7x MXUs are 2x256^2 -> prefer 256-aligned K/N dims; v5e's 4x128^2 is fine at 128.
    return "v5" not in _device_kind()


def _align_dim(n, prefer256):
    """Round up to 128, or to 256 on 256-wide-MXU chips when it costs <= ~12.5% extra."""
    p128 = _round_up(n, 128)
    if prefer256:
        p256 = _round_up(n, 256)
        if p256 <= (p128 * 9) // 8:
            return p256
    return p128


def _hidden_slab(hd, th, prefer256):
    """Balanced hidden-dim slabbing -> (slab width, padded hidden dim)."""
    if hd <= th:
        return hd, hd                         # single resident slab
    n_h = _cdiv(hd, th)
    th_eff = min(_align_dim(_cdiv(hd, n_h), prefer256), _round_up(hd, 128))
    return th_eff, _round_up(hd, th_eff)


def _row_tiles(m, tm, n_tc):
    """Balanced row tiling; guarantee >= n_tc tiles so the parallel axis feeds every TC."""
    n_row = _cdiv(m, tm)
    if n_tc > 1 and m >= 8 * n_tc:
        n_row = max(n_row, n_tc)
    tm_eff = min(_round_up(_cdiv(m, n_row), 8), _round_up(m, 8))
    return tm_eff, _round_up(m, tm_eff)


def _vmem_estimate(tm, th, c, co_pad, x_b, w_b, o_b, wbufs):
    """Pipelined block bytes + f32 accumulator + f32 intermediate h (with headroom)."""
    blocks = 2 * (tm * c * x_b + tm * co_pad * o_b + th * w_b + co_pad * w_b)
    blocks += wbufs * (c * th * w_b + th * co_pad * w_b)
    acc = tm * co_pad * 4
    interm = 2 * tm * th * 4
    return blocks + acc + interm


# ----------------------------- kernel ----------------------------------------------

def ffn_kernel(x_ref, w1_ref, b1_ref, w2_ref, b2_ref, o_ref, acc_ref, *, approximate):
    # grid = (row tiles [parallel], hidden slabs [arbitrary/reduction]).
    h_idx = pl.program_id(1)

    @pl.when(h_idx == 0)
    def _():
        acc_ref[...] = jnp.zeros_like(acc_ref)

    # fc1 on this hidden slab: native-dtype operands into the MXU, f32 accumulation.
    h = jnp.dot(x_ref[...], w1_ref[...], preferred_element_type=jnp.float32)
    h = h + b1_ref[...].astype(jnp.float32)      # (1, th) broadcasts over the row tile

    if approximate:
        # tanh-form GELU: the transcendental runs on the otherwise-idle EUP slot instead
        # of a ~20+ op VALU erf polynomial (the VALU slot was the binding unit before).
        h = jax.nn.gelu(h, approximate=True)
    else:
        # Exact GELU (bit-parity with torch.nn.GELU's default).
        h = 0.5 * h * (1.0 + jax.lax.erf(h * (1.0 / math.sqrt(2.0))))

    # fc2 partial product for this slab, accumulated in f32.
    acc_ref[...] += jnp.dot(h.astype(w2_ref.dtype), w2_ref[...],
                            preferred_element_type=jnp.float32)

    @pl.when(h_idx == pl.num_programs(1) - 1)
    def _():
        o_ref[...] = (acc_ref[...] + b2_ref[...].astype(jnp.float32)).astype(o_ref.dtype)


# ----------------------------- wrapper ---------------------------------------------

def prepare_ffn_params(w1, b1, w2, b2, *, th=1024):
    """Pad weights ONCE at init time (hidden dim + output columns) so the per-call jitted
    path does no HBM read+write of the weight matrices. Zero-padding is exact: gelu(0)=0
    so padded hidden columns contribute nothing; padded output columns are sliced off."""
    prefer256 = _prefer_256()
    hd, co = w1.shape[1], w2.shape[1]
    _, hd_pad = _hidden_slab(hd, th, prefer256)
    co_pad = _align_dim(co, prefer256)
    if hd_pad != hd:
        w1 = jnp.pad(w1, ((0, 0), (0, hd_pad - hd)))
        b1 = jnp.pad(b1, (0, hd_pad - hd))
    if hd_pad != hd or co_pad != co:
        w2 = jnp.pad(w2, ((0, hd_pad - hd), (0, co_pad - co)))
    if co_pad != co:
        b2 = jnp.pad(b2, (0, co_pad - co))
    return w1, b1, w2, b2


@partial(jax.jit, static_argnames=("out_features", "tm", "th", "approximate_gelu",
                                   "weight_buffers"))
def ffn_pallas(x, w1, b1, w2, b2, *, out_features=None, tm=None, th=1024,
               approximate_gelu=True, weight_buffers=2):
    """x: (B, N, C) -> (B, N, out_features). Fused FFN on the flattened (B*N, C) matrix."""
    B, N, C = x.shape
    Hd = w1.shape[1]
    Co = w2.shape[1]
    Co_out = Co if out_features is None else out_features
    M = B * N

    kind = _device_kind()
    prefer256 = _prefer_256()
    n_tc = _num_tensorcores()
    vmem_cap = _vmem_cap_bytes()

    # --- generation/dtype-aware tile planning ---------------------------------------
    # v6e at tm=512 is marginally weight-bandwidth bound (weights re-streamed per row
    # tile) -> default tm=1024 there, 512 elsewhere.  Then shrink (hidden slab first,
    # then the row tile) until the pipelined blocks + f32 accumulator + f32 intermediate
    # fit the VMEM budget -- this is what keeps v7x's 64 MiB (and f32 / large C, Co)
    # cases 2-deep pipelined instead of OOMing or single-buffering.
    tm_t = tm if tm is not None else (1024 if "v6" in kind else 512)
    th_t = th

    x_b = x.dtype.itemsize
    w_b = w1.dtype.itemsize
    o_b = x.dtype.itemsize
    Co_pad = _align_dim(Co, prefer256)
    budget = int(vmem_cap * 0.7)

    tm_eff, Mpad = _row_tiles(M, tm_t, n_tc)
    th_eff, Hd_pad = _hidden_slab(Hd, th_t, prefer256)
    while _vmem_estimate(tm_eff, th_eff, C, Co_pad, x_b, w_b, o_b, weight_buffers) > budget:
        if th_eff > 512:
            th_t = max(512, th_t // 2)
        elif tm_eff > 256:
            tm_t = max(256, tm_t // 2)
        else:
            break
        tm_eff, Mpad = _row_tiles(M, tm_t, n_tc)
        th_eff, Hd_pad = _hidden_slab(Hd, th_t, prefer256)

    # --- padding (weight pads are no-ops when prepare_ffn_params() was used) --------
    x2d = x.reshape(M, C)
    if Mpad != M:
        x2d = jnp.pad(x2d, ((0, Mpad - M), (0, 0)))
    if Hd_pad != Hd:
        w1 = jnp.pad(w1, ((0, 0), (0, Hd_pad - Hd)))
        b1 = jnp.pad(b1, (0, Hd_pad - Hd))
        w2 = jnp.pad(w2, ((0, Hd_pad - Hd), (0, 0)))
    if Co_pad != Co:
        w2 = jnp.pad(w2, ((0, 0), (0, Co_pad - Co)))
        b2 = jnp.pad(b2, (0, Co_pad - Co))
    b1_2d = b1.reshape(1, Hd_pad)
    b2_2d = b2.reshape(1, Co_pad)

    grid = (Mpad // tm_eff, Hd_pad // th_eff)

    # Optional 3-deep buffering of the weight slabs (worth sweeping on v6e's 128 MiB
    # when near the weight-bandwidth roofline); default 2 keeps v7x's budget safe.
    w_kwargs = {} if weight_buffers == 2 else {"pipeline_mode": pl.Buffered(weight_buffers)}
    in_specs = [
        pl.BlockSpec((tm_eff, C), lambda i, h: (i, 0)),                 # x row tile
        pl.BlockSpec((C, th_eff), lambda i, h: (0, h), **w_kwargs),     # W1 slab
        pl.BlockSpec((1, th_eff), lambda i, h: (0, h)),                 # b1 slab
        pl.BlockSpec((th_eff, Co_pad), lambda i, h: (h, 0), **w_kwargs),  # W2 slab
        pl.BlockSpec((1, Co_pad), lambda i, h: (0, 0)),                 # b2
    ]

    est = _vmem_estimate(tm_eff, th_eff, C, Co_pad, x_b, w_b, o_b, weight_buffers)
    vmem_limit = int(min(0.85 * vmem_cap, max(1.5 * est, 32 * 1024 * 1024)))

    out2d = pl.pallas_call(
        partial(ffn_kernel, approximate=approximate_gelu),
        out_shape=jax.ShapeDtypeStruct((Mpad, Co_pad), x.dtype),
        grid_spec=pltpu.PrefetchScalarGridSpec(
            num_scalar_prefetch=0,
            grid=grid,
            in_specs=in_specs,
            out_specs=pl.BlockSpec((tm_eff, Co_pad), lambda i, h: (i, 0)),
            scratch_shapes=[pltpu.VMEM((tm_eff, Co_pad), jnp.float32)],
        ),
        compiler_params=pltpu.CompilerParams(
            # rows shard across TensorCores (v7x megacore); hidden axis is the reduction.
            dimension_semantics=("parallel", "arbitrary"),
            vmem_limit_bytes=vmem_limit,
        ),
    )(x2d, w1, b1_2d, w2, b2_2d)

    return out2d[:M, :Co_out].reshape(B, N, Co_out)


# ----------------------------- init / reference / test -----------------------------

def init_ffn_params(key, in_features, hidden_features, out_features, dtype=jnp.float32):
    """Deterministic init mimicking nn.Linear's uniform(-1/sqrt(fan_in), 1/sqrt(fan_in))."""
    k1, k2, k3, k4 = jax.random.split(key, 4)
    bound1 = 1.0 / math.sqrt(in_features)
    bound2 = 1.0 / math.sqrt(hidden_features)
    # stored pre-transposed: (in, out)
    w1 = jax.random.uniform(k1, (in_features, hidden_features), dtype, -bound1, bound1)
    b1 = jax.random.uniform(k2, (hidden_features,), dtype, -bound1, bound1)
    w2 = jax.random.uniform(k3, (hidden_features, out_features), dtype, -bound2, bound2)
    b2 = jax.random.uniform(k4, (out_features,), dtype, -bound2, bound2)
    return w1, b1, w2, b2


def ffn_reference(x, w1, b1, w2, b2, approximate=False):
    h = x @ w1 + b1
    if approximate:
        h = jax.nn.gelu(h, approximate=True)
    else:
        h = 0.5 * h * (1.0 + jax.lax.erf(h / math.sqrt(2.0)))
    return h @ w2 + b2


if __name__ == "__main__":
    # Small shapes consistent with the module's forward(x, H, W): x is (B, H*W, C).
    B, H, W = 2, 8, 8
    in_features, hidden_features, out_features = 32, 64, 32
    N = H * W

    key = jax.random.PRNGKey(0)
    kx, kp = jax.random.split(key)
    x = jax.random.normal(kx, (B, N, in_features), jnp.float32)
    w1, b1, w2, b2 = init_ffn_params(kp, in_features, hidden_features, out_features)

    # Pad weights once, outside the per-call jitted path.
    w1p, b1p, w2p, b2p = prepare_ffn_params(w1, b1, w2, b2)

    # Exact-erf GELU path: bit-level parity with torch.nn.GELU default.
    out_exact = jax.block_until_ready(
        ffn_pallas(x, w1p, b1p, w2p, b2p, out_features=out_features,
                   approximate_gelu=False))
    # Default fast path: tanh-approx GELU on the EUP.
    out_fast = jax.block_until_ready(
        ffn_pallas(x, w1p, b1p, w2p, b2p, out_features=out_features))

    ref_exact = ffn_reference(x, w1, b1, w2, b2, approximate=False)
    ref_fast = ffn_reference(x, w1, b1, w2, b2, approximate=True)

    assert out_exact.shape == (B, N, out_features)
    assert jnp.allclose(out_exact, ref_exact, atol=1e-4, rtol=1e-4), "exact-GELU mismatch"
    assert jnp.allclose(out_fast, ref_fast, atol=1e-4, rtol=1e-4), "approx-GELU mismatch"
    # tanh-approx vs exact GELU: tiny bounded numeric delta (documented behaviour).
    assert jnp.allclose(out_fast, ref_exact, atol=5e-3, rtol=5e-3), "approx too far from exact"

    print("KERNEL_OK")
</pallas_src>

<mosaic_0001>
module attributes {stable_mosaic.version = 11 : i64} {
  func.func @ffn_kernel(%arg0: i32, %arg1: i32, %arg2: memref<128x32xf32, #tpu.memory_space<vmem>>, %arg3: memref<32x64xf32, #tpu.memory_space<vmem>>, %arg4: memref<1x64xf32, #tpu.memory_space<vmem>>, %arg5: memref<64x128xf32, #tpu.memory_space<vmem>>, %arg6: memref<1x128xf32, #tpu.memory_space<vmem>>, %arg7: memref<128x128xf32, #tpu.memory_space<vmem>>, %arg8: memref<128x128xf32, #tpu.memory_space<vmem>>) attributes {dimension_semantics = [#tpu.dimension_semantics<parallel>, #tpu.dimension_semantics<arbitrary>], iteration_bounds = array<i64: 1, 1>, scalar_prefetch = 0 : i64, scratch_operands = 1 : i64, tpu.core_type = #tpu.core_type<tc>, window_params = [{transform_indices = @transform_0, window_bounds = array<i64: 128, 32>}, {transform_indices = @transform_1, window_bounds = array<i64: 32, 64>}, {transform_indices = @transform_2, window_bounds = array<i64: 1, 64>}, {transform_indices = @transform_3, window_bounds = array<i64: 64, 128>}, {pipeline_mode = #tpu.pipeline_mode<synchronous>, transform_indices = @transform_4, window_bounds = array<i64: 1, 128>}, {transform_indices = @transform_5, window_bounds = array<i64: 128, 128>}]} {
    %c0_i32 = arith.constant 0 : i32
    %0 = arith.cmpi eq, %arg1, %c0_i32 : i32
    %1 = arith.extui %0 : i1 to i32
    %c0_i32_0 = arith.constant 0 : i32
    %2 = arith.cmpi ne, %1, %c0_i32_0 : i32
    scf.if %2 {
      %cst_18 = arith.constant 0.000000e+00 : f32
      %25 = vector.broadcast %cst_18 : f32 to vector<128x128xf32>
      %c0_19 = arith.constant 0 : index
      %c0_20 = arith.constant 0 : index
      %26 = vector.load %arg8[%c0_19, %c0_20] : memref<128x128xf32, #tpu.memory_space<vmem>>, vector<128x128xf32>
      tpu.vector_store %arg8[%c0_19, %c0_20], %25 {strides = array<i32>} : memref<128x128xf32, #tpu.memory_space<vmem>>, vector<128x128xf32>,
    } else {
    }
    %c0 = arith.constant 0 : index
    %c0_1 = arith.constant 0 : index
    %3 = vector.load %arg2[%c0, %c0_1] : memref<128x32xf32, #tpu.memory_space<vmem>>, vector<128x32xf32>
    %c0_2 = arith.constant 0 : index
    %c0_3 = arith.constant 0 : index
    %4 = vector.load %arg3[%c0_2, %c0_3] : memref<32x64xf32, #tpu.memory_space<vmem>>, vector<32x64xf32>
    %cst = arith.constant dense<0.000000e+00> : vector<128x64xf32>
    %5 = tpu.matmul %3, %4, %cst {dimension_numbers = #tpu.dot_dimension_numbers<[1], [0], [0], [1], [0, 0, 1, 1], [], []>} : vector<128x32xf32>, vector<32x64xf32>, vector<128x64xf32> -> vector<128x64xf32>
    %c0_4 = arith.constant 0 : index
    %c0_5 = arith.constant 0 : index
    %6 = vector.load %arg4[%c0_4, %c0_5] : memref<1x64xf32, #tpu.memory_space<vmem>>, vector<1x64xf32>
    %7 = vector.broadcast %6 : vector<1x64xf32> to vector<128x64xf32>
    %8 = arith.addf %5, %7 : vector<128x64xf32>
    %cst_6 = arith.constant 5.000000e-01 : f32
    %9 = vector.broadcast %cst_6 : f32 to vector<128x64xf32>
    %10 = arith.mulf %9, %8 : vector<128x64xf32>
    %cst_7 = arith.constant 0.707106769 : f32
    %11 = vector.broadcast %cst_7 : f32 to vector<128x64xf32>
    %12 = arith.mulf %8, %11 : vector<128x64xf32>
    %13 = math.erf %12 : vector<128x64xf32>
    %cst_8 = arith.constant 1.000000e+00 : f32
    %14 = vector.broadcast %cst_8 : f32 to vector<128x64xf32>
    %15 = arith.addf %14, %13 : vector<128x64xf32>
    %16 = arith.mulf %10, %15 : vector<128x64xf32>
    %c0_9 = arith.constant 0 : index
    %c0_10 = arith.constant 0 : index
    %17 = vector.load %arg8[%c0_9, %c0_10] : memref<128x128xf32, #tpu.memory_space<vmem>>, vector<128x128xf32>
    %c0_11 = arith.constant 0 : index
    %c0_12 = arith.constant 0 : index
    %18 = vector.load %arg5[%c0_11, %c0_12] : memref<64x128xf32, #tpu.memory_space<vmem>>, vector<64x128xf32>
    %cst_13 = arith.constant dense<0.000000e+00> : vector<128x128xf32>
    %19 = tpu.matmul %16, %18, %cst_13 {dimension_numbers = #tpu.dot_dimension_numbers<[1], [0], [0], [1], [0, 0, 1, 1], [], []>} : vector<128x64xf32>, vector<64x128xf32>, vector<128x128xf32> -> vector<128x128xf32>
    %20 = arith.addf %17, %19 : vector<128x128xf32>
    %c0_14 = arith.constant 0 : index
    %c0_15 = arith.constant 0 : index
    %21 = vector.load %arg8[%c0_14, %c0_15] : memref<128x128xf32, #tpu.memory_space<vmem>>, vector<128x128xf32>
    tpu.vector_store %arg8[%c0_14, %c0_15], %20 {strides = array<i32>} : memref<128x128xf32, #tpu.memory_space<vmem>>, vector<128x128xf32>,
    %c0_i32_16 = arith.constant 0 : i32
    %22 = arith.cmpi eq, %arg1, %c0_i32_16 : i32
    %23 = arith.extui %22 : i1 to i32
    %c0_i32_17 = arith.constant 0 : i32
    %24 = arith.cmpi ne, %23, %c0_i32_17 : i32
    scf.if %24 {
      %c0_18 = arith.constant 0 : index
      %c0_19 = arith.constant 0 : index
      %25 = vector.load %arg8[%c0_18, %c0_19] : memref<128x128xf32, #tpu.memory_space<vmem>>, vector<128x128xf32>
      %c0_20 = arith.constant 0 : index
      %c0_21 = arith.constant 0 : index
      %26 = vector.load %arg6[%c0_20, %c0_21] : memref<1x128xf32, #tpu.memory_space<vmem>>, vector<1x128xf32>
      %27 = vector.broadcast %26 : vector<1x128xf32> to vector<128x128xf32>
      %28 = arith.addf %25, %27 : vector<128x128xf32>
      %c0_22 = arith.constant 0 : index
      %c0_23 = arith.constant 0 : index
      %29 = vector.load %arg7[%c0_22, %c0_23] : memref<128x128xf32, #tpu.memory_space<vmem>>, vector<128x128xf32>
      tpu.vector_store %arg7[%c0_22, %c0_23], %28 {strides = array<i32>} : memref<128x128xf32, #tpu.memory_space<vmem>>, vector<128x128xf32>,
    } else {
    }
    return
  }
  func.func @transform_0(%arg0: i32, %arg1: i32) -> (i32, i32) {
    %c0_i32 = arith.constant 0 : i32
    %c0_i32_0 = arith.constant 0 : i32
    return %arg0, %c0_i32 : i32, i32
  }
  func.func @transform_1(%arg0: i32, %arg1: i32) -> (i32, i32) {
    %c0_i32 = arith.constant 0 : i32
    %c0_i32_0 = arith.constant 0 : i32
    return %c0_i32, %arg1 : i32, i32
  }
  func.func @transform_2(%arg0: i32, %arg1: i32) -> (i32, i32) {
    %c0_i32 = arith.constant 0 : i32
    %c0_i32_0 = arith.constant 0 : i32
    return %c0_i32, %arg1 : i32, i32
  }
  func.func @transform_3(%arg0: i32, %arg1: i32) -> (i32, i32) {
    %c0_i32 = arith.constant 0 : i32
    %c0_i32_0 = arith.constant 0 : i32
    return %arg1, %c0_i32 : i32, i32
  }
  func.func @transform_4(%arg0: i32, %arg1: i32) -> (i32, i32) {
    %c0_i32 = arith.constant 0 : i32
    %c0_i32_0 = arith.constant 0 : i32
    %c0_i32_1 = arith.constant 0 : i32
    return %c0_i32, %c0_i32_0 : i32, i32
  }
  func.func @transform_5(%arg0: i32, %arg1: i32) -> (i32, i32) {
    %c0_i32 = arith.constant 0 : i32
    %c0_i32_0 = arith.constant 0 : i32
    return %arg0, %c0_i32 : i32, i32
  }
}

</mosaic_0001>

<llo_original>
// kernel: ffn_pallas.1
$region0: #{ffn_pallas.1}
  #allocation0 [shape = 'u32[]', space=smem, size = 0x4, offset = 0x4, fixed_abs, tag = 'smem constant byte address 0x4 - core index']
  #allocation1 [shape = 'u32[144,128]{1,0:T(1,128)}', space=vmem, size = 0x12000, scoped, tag = 'internal scratch']
  #allocation2 [shape = 'f32[128,128]{1,0:T(8,128)}', space=vmem, size = 0x10000, scoped, tag = 'scratch operand']
  %s0 = inlined_call_operand.vmem [shape: f32[128,32], index: 0, kind: input, shape index: {}]
  %s1 = inlined_call_operand.vmem [shape: f32[32,64], index: 1, kind: input, shape index: {}]
  %s2 = inlined_call_operand.vmem [shape: f32[1,64], index: 2, kind: input, shape index: {}]
  %s3 = inlined_call_operand.vmem [shape: f32[64,128], index: 3, kind: input, shape index: {}]
  %s4 = inlined_call_operand.vmem [shape: f32[1,128], index: 4, kind: input, shape index: {}]
  %s5 = inlined_call_operand.vmem [shape: f32[128,128], index: 5, kind: output, shape index: {}]
  %s6 = sld [smem:[#allocation0]]
  $region38: #{ffn_pallas.1} parent=0
    _
  %s8 = ssub.s32 1, %s6
  %s9 = scalar_select 0, %s8, %s6
  // Predicated region
  $region2: #{ffn_pallas.1} parent=0 // pred_check
    _
  $region3: #{ffn_pallas.1} parent=0 // pred_check_branch
    %11 = sbr.rel (0) target = $region5
  $region4: #{ffn_pallas.1} parent=0 // pred_region
    _
  $region5: #{ffn_pallas.1} parent=0 // pred_fallthru
    _
  // Predicated region
  $region6: #{ffn_pallas.1} parent=0 // pred_check
    _
  $region7: #{ffn_pallas.1} parent=0 // pred_check_branch
    %13 = sbr.rel (0) target = $region9
  $region8: #{ffn_pallas.1} parent=0 // pred_region
    _
  $region9: #{ffn_pallas.1} parent=0 // pred_fallthru
    _
  // Predicated region
  $region10: #{ffn_pallas.1} parent=0 // pred_check
    _
  $region11: #{ffn_pallas.1} parent=0 // pred_check_branch
    %15 = sbr.rel (0) target = $region13
  $region12: #{ffn_pallas.1} parent=0 // pred_region
    _
  $region13: #{ffn_pallas.1} parent=0 // pred_fallthru
    _
  // Predicated region
  $region14: #{ffn_pallas.1} parent=0 // pred_check
    _
  $region15: #{ffn_pallas.1} parent=0 // pred_check_branch
    %17 = sbr.rel (0) target = $region17
  $region16: #{ffn_pallas.1} parent=0 // pred_region
    _
  $region17: #{ffn_pallas.1} parent=0 // pred_fallthru
    _
  // Predicated region
  $region18: #{ffn_pallas.1} parent=0 // pred_check
    _
  $region19: #{ffn_pallas.1} parent=0 // pred_check_branch
    %19 = sbr.rel (0) target = $region21
  $region20: #{ffn_pallas.1} parent=0 // pred_region
    _
  $region21: #{ffn_pallas.1} parent=0 // pred_fallthru
    _
  %p20 = scmp.eq.s32.totalorder 0, 0
  // Predicated region
  $region22: #{ffn_pallas.1} parent=0 // pred_check
    %p21 = pneg %p20
  $region23: #{ffn_pallas.1} parent=0 // pred_check_branch
    %23 = sbr.rel (%p21) target = $region25
  $region24: #{ffn_pallas.1} parent=0 // pred_region
    %24 = vst [vmem:[#allocation2] sm:$0xff] 0.0
    %25 = vst [vmem:[#allocation2 + $0x8] sm:$0xff] 0.0
    %26 = vst [vmem:[#allocation2 + $0x10] sm:$0xff] 0.0
    %27 = vst [vmem:[#allocation2 + $0x18] sm:$0xff] 0.0
    %28 = vst [vmem:[#allocation2 + $0x20] sm:$0xff] 0.0
    %29 = vst [vmem:[#allocation2 + $0x28] sm:$0xff] 0.0
    %30 = vst [vmem:[#allocation2 + $0x30] sm:$0xff] 0.0
    %31 = vst [vmem:[#allocation2 + $0x38] sm:$0xff] 0.0
    %32 = vst [vmem:[#allocation2 + $0x40] sm:$0xff] 0.0
    %33 = vst [vmem:[#allocation2 + $0x48] sm:$0xff] 0.0
    %34 = vst [vmem:[#allocation2 + $0x50] sm:$0xff] 0.0
    %35 = vst [vmem:[#allocation2 + $0x58] sm:$0xff] 0.0
    %36 = vst [vmem:[#allocation2 + $0x60] sm:$0xff] 0.0
    %37 = vst [vmem:[#allocation2 + $0x68] sm:$0xff] 0.0
    %38 = vst [vmem:[#allocation2 + $0x70] sm:$0xff] 0.0
    %39 = vst [vmem:[#allocation2 + $0x78] sm:$0xff] 0.0
  $region25: #{ffn_pallas.1} parent=0 // pred_fallthru
    _
  %v40 = vld [vmem:[%s0] sm:$0xff]
  %v41 = vld [vmem:[%s0 + $0x8] sm:$0xff]
  %v42 = vld [vmem:[%s0 + $0x10] sm:$0xff]
  %v43 = vld [vmem:[%s0 + $0x18] sm:$0xff]
  %v44 = vld [vmem:[%s0 + $0x20] sm:$0xff]
  %v45 = vld [vmem:[%s0 + $0x28] sm:$0xff]
  %v46 = vld [vmem:[%s0 + $0x30] sm:$0xff]
  %v47 = vld [vmem:[%s0 + $0x38] sm:$0xff]
  %v48 = vld [vmem:[%s0 + $0x40] sm:$0xff]
  %v49 = vld [vmem:[%s0 + $0x48] sm:$0xff]
  %v50 = vld [vmem:[%s0 + $0x50] sm:$0xff]
  %v51 = vld [vmem:[%s0 + $0x58] sm:$0xff]
  %v52 = vld [vmem:[%s0 + $0x60] sm:$0xff]
  %v53 = vld [vmem:[%s0 + $0x68] sm:$0xff]
  %v54 = vld [vmem:[%s0 + $0x70] sm:$0xff]
  %v55 = vld [vmem:[%s0 + $0x78] sm:$0xff]
  %v56 = vld [vmem:[%s1] sm:$0xff]
  %v57 = vld [vmem:[%s1 + $0x8] sm:$0xff]
  %v58 = vld [vmem:[%s1 + $0x10] sm:$0xff]
  %v59 = vld [vmem:[%s1 + $0x18] sm:$0xff]
  %v60 = vld [vmem:[%s2] sm:$0x1]
  %v62 = vlaneseq
  %v63 = vshrl.u32 %v62, 7
  %v64 = vsub.s32 0, %v63
  %v65 = vrot.slane %v60, %v64
  %vm67 = vcmask 261120
  %v69 = vsel %vm67, %v40, 0
  %v72 = vsel %vm67, %v41, 0
  %v75 = vsel %vm67, %v42, 0
  %v78 = vsel %vm67, %v43, 0
  %v81 = vsel %vm67, %v44, 0
  %v84 = vsel %vm67, %v45, 0
  %v87 = vsel %vm67, %v46, 0
  %v90 = vsel %vm67, %v47, 0
  %v93 = vsel %vm67, %v48, 0
  %v96 = vsel %vm67, %v49, 0
  %v99 = vsel %vm67, %v50, 0
  %v102 = vsel %vm67, %v51, 0
  %v105 = vsel %vm67, %v52, 0
  %v108 = vsel %vm67, %v53, 0
  %v111 = vsel %vm67, %v54, 0
  %v114 = vsel %vm67, %v55, 0
  %116 = vmatprep.subr.mxu0 0.0
  %117 = vmatpush1.msra.mxu0 0.0
  %118 = vmatprep.subr.mxu0 0.0
  %119 = vmatpush1.msra.mxu0 0.0
  %120 = vmatprep.subr.mxu0 0.0
  %121 = vmatpush1.msra.mxu0 0.0
  %122 = vmatprep.subr.mxu0 0.0
  %123 = vmatpush1.msra.mxu0 0.0
  %124 = vmatprep.subr.mxu0 0.0
  %125 = vmatpush1.msra.mxu0 0.0
  %126 = vmatprep.subr.mxu0 0.0
  %127 = vmatpush1.msra.mxu0 0.0
  %128 = vmatprep.subr.mxu0 0.0
  %129 = vmatpush1.msra.mxu0 0.0
  %130 = vmatprep.subr.mxu0 0.0
  %131 = vmatpush1.msra.mxu0 0.0
  %132 = vmatprep.subr.mxu0 0.0
  %133 = vmatpush1.msra.mxu0 0.0
  %134 = vmatprep.subr.mxu0 0.0
  %135 = vmatpush1.msra.mxu0 0.0
  %136 = vmatprep.subr.mxu0 0.0
  %137 = vmatpush1.msra.mxu0 0.0
  %138 = vmatprep.subr.mxu0 0.0
  %139 = vmatpush1.msra.mxu0 0.0
  %140 = vmatprep.subr.mxu0 0.0
  %141 = vmatpush1.msra.mxu0 %v59
  %142 = vmatprep.subr.mxu0 0.0
  %143 = vmatpush1.msra.mxu0 %v58
  %144 = vmatprep.subr.mxu0 0.0
  %145 = vmatpush1.msra.mxu0 %v57
  %146 = vmatprep.subr.mxu0 0.0
  %147 = vmatpush1.msra.mxu0 %v56
  %148 = vmatprep.subr.mxu0 0.0
  %149 = vmatpush2.msra.mxu0 0.0
  %150 = vmatprep.subr.mxu0 0.0
  %151 = vmatpush2.msra.mxu0 0.0
  %152 = vmatprep.subr.mxu0 0.0
  %153 = vmatpush2.msra.mxu0 0.0
  %154 = vmatprep.subr.mxu0 0.0
  %155 = vmatpush2.msra.mxu0 0.0
  %156 = vmatprep.subr.mxu0 0.0
  %157 = vmatpush2.msra.mxu0 0.0
  %158 = vmatprep.subr.mxu0 0.0
  %159 = vmatpush2.msra.mxu0 0.0
  %160 = vmatprep.subr.mxu0 0.0
  %161 = vmatpush2.msra.mxu0 0.0
  %162 = vmatprep.subr.mxu0 0.0
  %163 = vmatpush2.msra.mxu0 0.0
  %164 = vmatprep.subr.mxu0 0.0
  %165 = vmatpush2.msra.mxu0 0.0
  %166 = vmatprep.subr.mxu0 0.0
  %167 = vmatpush2.msra.mxu0 0.0
  %168 = vmatprep.subr.mxu0 0.0
  %169 = vmatpush2.msra.mxu0 0.0
  %170 = vmatprep.subr.mxu0 0.0
  %171 = vmatpush2.msra.mxu0 0.0
  %172 = vmatprep.subr.mxu0 0.0
  %173 = vmatpush2.msra.mxu0 0.0
  %174 = vmatprep.subr.mxu0 0.0
  %175 = vmatpush2.msra.mxu0 0.0
  %176 = vmatprep.subr.mxu0 0.0
  %177 = vmatpush2.msra.mxu0 0.0
  %178 = vmatprep.subr.mxu0 0.0
  %179 = vmatpush2.msra.mxu0 0.0
  %180 = vmatprep.mubr.f32.mxu0 0.0
  %181 = vmatmul.mubr.f32.gmra.mxu0 %v69
  %v182 = vpop.f32.mrf.mxu0
  %v183 = vadd.f32 %v65, %v182
  %v184 = vpop.f32.mrf.mxu0
  %185 = vmatprep.mubr.f32.mxu0 0.0
  %186 = vmatmul.mubr.f32.gmra.mxu0 %v72
  %v187 = vpop.f32.mrf.mxu0
  %v188 = vadd.f32 %v65, %v187
  %v189 = vpop.f32.mrf.mxu0
  %190 = vmatprep.mubr.f32.mxu0 0.0
  %191 = vmatmul.mubr.f32.gmra.mxu0 %v75
  %v192 = vpop.f32.mrf.mxu0
  %v193 = vadd.f32 %v65, %v192
  %v194 = vpop.f32.mrf.mxu0
  %195 = vmatprep.mubr.f32.mxu0 0.0
  %196 = vmatmul.mubr.f32.gmra.mxu0 %v78
  %v197 = vpop.f32.mrf.mxu0
  %v198 = vadd.f32 %v65, %v197
  %v199 = vpop.f32.mrf.mxu0
  %200 = vmatprep.mubr.f32.mxu0 0.0
  %201 = vmatmul.mubr.f32.gmra.mxu0 %v81
  %v202 = vpop.f32.mrf.mxu0
  %v203 = vadd.f32 %v65, %v202
  %v204 = vpop.f32.mrf.mxu0
  %205 = vmatprep.mubr.f32.mxu0 0.0
  %206 = vmatmul.mubr.f32.gmra.mxu0 %v84
  %v207 = vpop.f32.mrf.mxu0
  %v208 = vadd.f32 %v65, %v207
  %v209 = vpop.f32.mrf.mxu0
  %210 = vmatprep.mubr.f32.mxu0 0.0
  %211 = vmatmul.mubr.f32.gmra.mxu0 %v87
  %v212 = vpop.f32.mrf.mxu0
  %v213 = vadd.f32 %v65, %v212
  %v214 = vpop.f32.mrf.mxu0
  %215 = vmatprep.mubr.f32.mxu0 0.0
  %216 = vmatmul.mubr.f32.gmra.mxu0 %v90
  %v217 = vpop.f32.mrf.mxu0
  %v218 = vadd.f32 %v65, %v217
  %v219 = vpop.f32.mrf.mxu0
  %220 = vmatprep.mubr.f32.mxu0 0.0
  %221 = vmatmul.mubr.f32.gmra.mxu0 %v93
  %v222 = vpop.f32.mrf.mxu0
  %v223 = vadd.f32 %v65, %v222
  %v224 = vpop.f32.mrf.mxu0
  %225 = vmatprep.mubr.f32.mxu0 0.0
  %226 = vmatmul.mubr.f32.gmra.mxu0 %v96
  %v227 = vpop.f32.mrf.mxu0
  %v228 = vadd.f32 %v65, %v227
  %v229 = vpop.f32.mrf.mxu0
  %230 = vmatprep.mubr.f32.mxu0 0.0
  %231 = vmatmul.mubr.f32.gmra.mxu0 %v99
  %v232 = vpop.f32.mrf.mxu0
  %v233 = vadd.f32 %v65, %v232
  %v234 = vpop.f32.mrf.mxu0
  %235 = vmatprep.mubr.f32.mxu0 0.0
  %236 = vmatmul.mubr.f32.gmra.mxu0 %v102
  %v237 = vpop.f32.mrf.mxu0
  %v238 = vadd.f32 %v65, %v237
  %v239 = vpop.f32.mrf.mxu0
  %240 = vmatprep.mubr.f32.mxu0 0.0
  %241 = vmatmul.mubr.f32.gmra.mxu0 %v105
  %v242 = vpop.f32.mrf.mxu0
  %v243 = vadd.f32 %v65, %v242
  %v244 = vpop.f32.mrf.mxu0
  %245 = vmatprep.mubr.f32.mxu0 0.0
  %246 = vmatmul.mubr.f32.gmra.mxu0 %v108
  %v247 = vpop.f32.mrf.mxu0
  %v248 = vadd.f32 %v65, %v247
  %v249 = vpop.f32.mrf.mxu0
  %250 = vmatprep.mubr.f32.mxu0 0.0
  %251 = vmatmul.mubr.f32.gmra.mxu0 %v111
  %v252 = vpop.f32.mrf.mxu0
  %v253 = vadd.f32 %v65, %v252
  %v254 = vpop.f32.mrf.mxu0
  %255 = vmatprep.mubr.f32.mxu0 0.0
  %256 = vmatmul.mubr.f32.gmra.mxu0 %v114
  %v257 = vpop.f32.mrf.mxu0
  %v258 = vadd.f32 %v65, %v257
  %v259 = vpop.f32.mrf.mxu0
  %260 = vdwg.mxu0
  %v261 = vmul.f32 %v183, 0.5
  %v262 = vmul.f32 %v188, 0.5
  %v263 = vmul.f32 %v193, 0.5
  %v264 = vmul.f32 %v198, 0.5
  %v265 = vmul.f32 %v203, 0.5
  %v266 = vmul.f32 %v208, 0.5
  %v267 = vmul.f32 %v213, 0.5
  %v268 = vmul.f32 %v218, 0.5
  %v269 = vmul.f32 %v223, 0.5
  %v270 = vmul.f32 %v228, 0.5
  %v271 = vmul.f32 %v233, 0.5
  %v272 = vmul.f32 %v238, 0.5
  %v273 = vmul.f32 %v243, 0.5
  %v274 = vmul.f32 %v248, 0.5
  %v275 = vmul.f32 %v253, 0.5
  %v276 = vmul.f32 %v258, 0.5
  %v277 = vmul.f32 %v183, 0.70710677
  %v278 = vmul.f32 %v188, 0.70710677
  %v279 = vmul.f32 %v193, 0.70710677
  %v280 = vmul.f32 %v198, 0.70710677
  %v281 = vmul.f32 %v203, 0.70710677
  %v282 = vmul.f32 %v208, 0.70710677
  %v283 = vmul.f32 %v213, 0.70710677
  %v284 = vmul.f32 %v218, 0.70710677
  %v285 = vmul.f32 %v223, 0.70710677
  %v286 = vmul.f32 %v228, 0.70710677
  %v287 = vmul.f32 %v233, 0.70710677
  %v288 = vmul.f32 %v238, 0.70710677
  %v289 = vmul.f32 %v243, 0.70710677
  %v290 = vmul.f32 %v248, 0.70710677
  %v291 = vmul.f32 %v253, 0.70710677
  %v292 = vmul.f32 %v258, 0.70710677
  %v293 = verf.f32.pop %v277
  %v294 = verf.f32.pop %v278
  %v295 = verf.f32.pop %v279
  %v296 = verf.f32.pop %v280
  %v297 = verf.f32.pop %v281
  %v298 = verf.f32.pop %v282
  %v299 = verf.f32.pop %v283
  %v300 = verf.f32.pop %v284
  %v301 = verf.f32.pop %v285
  %v302 = verf.f32.pop %v286
  %v303 = verf.f32.pop %v287
  %v304 = verf.f32.pop %v288
  %v305 = verf.f32.pop %v289
  %v306 = verf.f32.pop %v290
  %v307 = verf.f32.pop %v291
  %v308 = verf.f32.pop %v292
  %v309 = vadd.f32 %v293, 1.0
  %v310 = vadd.f32 %v294, 1.0
  %v311 = vadd.f32 %v295, 1.0
  %v312 = vadd.f32 %v296, 1.0
  %v313 = vadd.f32 %v297, 1.0
  %v314 = vadd.f32 %v298, 1.0
  %v315 = vadd.f32 %v299, 1.0
  %v316 = vadd.f32 %v300, 1.0
  %v317 = vadd.f32 %v301, 1.0
  %v318 = vadd.f32 %v302, 1.0
  %v319 = vadd.f32 %v303, 1.0
  %v320 = vadd.f32 %v304, 1.0
  %v321 = vadd.f32 %v305, 1.0
  %v322 = vadd.f32 %v306, 1.0
  %v323 = vadd.f32 %v307, 1.0
  %v324 = vadd.f32 %v308, 1.0
  %v325 = vmul.f32 %v261, %v309
  %v326 = vmul.f32 %v262, %v310
  %v327 = vmul.f32 %v263, %v311
  %v328 = vmul.f32 %v264, %v312
  %v329 = vmul.f32 %v265, %v313
  %v330 = vmul.f32 %v266, %v314
  %v331 = vmul.f32 %v267, %v315
  %v332 = vmul.f32 %v268, %v316
  %v333 = vmul.f32 %v269, %v317
  %v334 = vmul.f32 %v270, %v318
  %v335 = vmul.f32 %v271, %v319
  %v336 = vmul.f32 %v272, %v320
  %v337 = vmul.f32 %v273, %v321
  %v338 = vmul.f32 %v274, %v322
  %v339 = vmul.f32 %v275, %v323
  %v340 = vmul.f32 %v276, %v324
  %v341 = vld [vmem:[#allocation2] sm:$0xff]
  %v342 = vld [vmem:[#allocation2 + $0x8] sm:$0xff]
  %v343 = vld [vmem:[#allocation2 + $0x10] sm:$0xff]
  %v344 = vld [vmem:[#allocation2 + $0x18] sm:$0xff]
  %v345 = vld [vmem:[#allocation2 + $0x20] sm:$0xff]
  %v346 = vld [vmem:[#allocation2 + $0x28] sm:$0xff]
  %v347 = vld [vmem:[#allocation2 + $0x30] sm:$0xff]
  %v348 = vld [vmem:[#allocation2 + $0x38] sm:$0xff]
  %v349 = vld [vmem:[#allocation2 + $0x40] sm:$0xff]
  %v350 = vld [vmem:[#allocation2 + $0x48] sm:$0xff]
  %v351 = vld [vmem:[#allocation2 + $0x50] sm:$0xff]
  %v352 = vld [vmem:[#allocation2 + $0x58] sm:$0xff]
  %v353 = vld [vmem:[#allocation2 + $0x60] sm:$0xff]
  %v354 = vld [vmem:[#allocation2 + $0x68] sm:$0xff]
  %v355 = vld [vmem:[#allocation2 + $0x70] sm:$0xff]
  %v356 = vld [vmem:[#allocation2 + $0x78] sm:$0xff]
  %v357 = vld [vmem:[%s3] sm:$0xff]
  %v358 = vld [vmem:[%s3 + $0x8] sm:$0xff]
  %v359 = vld [vmem:[%s3 + $0x10] sm:$0xff]
  %v360 = vld [vmem:[%s3 + $0x18] sm:$0xff]
  %v361 = vld [vmem:[%s3 + $0x20] sm:$0xff]
  %v362 = vld [vmem:[%s3 + $0x28] sm:$0xff]
  %v363 = vld [vmem:[%s3 + $0x30] sm:$0xff]
  %v364 = vld [vmem:[%s3 + $0x38] sm:$0xff]
  %vm365 = vcmask 523264
  %v367 = vsel %vm365, %v325, 0
  %v370 = vsel %vm365, %v326, 0
  %v373 = vsel %vm365, %v327, 0
  %v376 = vsel %vm365, %v328, 0
  %v379 = vsel %vm365, %v329, 0
  %v382 = vsel %vm365, %v330, 0
  %v385 = vsel %vm365, %v331, 0
  %v388 = vsel %vm365, %v332, 0
  %v391 = vsel %vm365, %v333, 0
  %v394 = vsel %vm365, %v334, 0
  %v397 = vsel %vm365, %v335, 0
  %v400 = vsel %vm365, %v336, 0
  %v403 = vsel %vm365, %v337, 0
  %v406 = vsel %vm365, %v338, 0
  %v409 = vsel %vm365, %v339, 0
  %v412 = vsel %vm365, %v340, 0
  %414 = vmatprep.subr.mxu0 0.0
  %415 = vmatpush1.msra.mxu0 0.0
  %416 = vmatprep.subr.mxu0 0.0
  %417 = vmatpush1.msra.mxu0 0.0
  %418 = vmatprep.subr.mxu0 0.0
  %419 = vmatpush1.msra.mxu0 0.0
  %420 = vmatprep.subr.mxu0 0.0
  %421 = vmatpush1.msra.mxu0 0.0
  %422 = vmatprep.subr.mxu0 0.0
  %423 = vmatpush1.msra.mxu0 0.0
  %424 = vmatprep.subr.mxu0 0.0
  %425 = vmatpush1.msra.mxu0 0.0
  %426 = vmatprep.subr.mxu0 0.0
  %427 = vmatpush1.msra.mxu0 0.0
  %428 = vmatprep.subr.mxu0 0.0
  %429 = vmatpush1.msra.mxu0 0.0
  %430 = vmatprep.subr.mxu0 0.0
  %431 = vmatpush1.msra.mxu0 %v364
  %432 = vmatprep.subr.mxu0 0.0
  %433 = vmatpush1.msra.mxu0 %v363
  %434 = vmatprep.subr.mxu0 0.0
  %435 = vmatpush1.msra.mxu0 %v362
  %436 = vmatprep.subr.mxu0 0.0
  %437 = vmatpush1.msra.mxu0 %v361
  %438 = vmatprep.subr.mxu0 0.0
  %439 = vmatpush1.msra.mxu0 %v360
  %440 = vmatprep.subr.mxu0 0.0
  %441 = vmatpush1.msra.mxu0 %v359
  %442 = vmatprep.subr.mxu0 0.0
  %443 = vmatpush1.msra.mxu0 %v358
  %444 = vmatprep.subr.mxu0 0.0
  %445 = vmatpush1.msra.mxu0 %v357
  %446 = vmatprep.subr.mxu0 0.0
  %447 = vmatpush2.msra.mxu0 0.0
  %448 = vmatprep.subr.mxu0 0.0
  %449 = vmatpush2.msra.mxu0 0.0
  %450 = vmatprep.subr.mxu0 0.0
  %451 = vmatpush2.msra.mxu0 0.0
  %452 = vmatprep.subr.mxu0 0.0
  %453 = vmatpush2.msra.mxu0 0.0
  %454 = vmatprep.subr.mxu0 0.0
  %455 = vmatpush2.msra.mxu0 0.0
  %456 = vmatprep.subr.mxu0 0.0
  %457 = vmatpush2.msra.mxu0 0.0
  %458 = vmatprep.subr.mxu0 0.0
  %459 = vmatpush2.msra.mxu0 0.0
  %460 = vmatprep.subr.mxu0 0.0
  %461 = vmatpush2.msra.mxu0 0.0
  %462 = vmatprep.subr.mxu0 0.0
  %463 = vmatpush2.msra.mxu0 0.0
  %464 = vmatprep.subr.mxu0 0.0
  %465 = vmatpush2.msra.mxu0 0.0
  %466 = vmatprep.subr.mxu0 0.0
  %467 = vmatpush2.msra.mxu0 0.0
  %468 = vmatprep.subr.mxu0 0.0
  %469 = vmatpush2.msra.mxu0 0.0
  %470 = vmatprep.subr.mxu0 0.0
  %471 = vmatpush2.msra.mxu0 0.0
  %472 = vmatprep.subr.mxu0 0.0
  %473 = vmatpush2.msra.mxu0 0.0
  %474 = vmatprep.subr.mxu0 0.0
  %475 = vmatpush2.msra.mxu0 0.0
  %476 = vmatprep.subr.mxu0 0.0
  %477 = vmatpush2.msra.mxu0 0.0
  %478 = vmatprep.mubr.f32.mxu0 0.0
  %479 = vmatmul.mubr.f32.gmra.mxu0 %v367
  %v480 = vpop.f32.mrf.mxu0
  %v481 = vadd.f32 0.0, %v480
  %v482 = vpop.f32.mrf.mxu0
  %483 = vmatprep.mubr.f32.mxu0 0.0
  %484 = vmatmul.mubr.f32.gmra.mxu0 %v370
  %v485 = vpop.f32.mrf.mxu0
  %v486 = vadd.f32 0.0, %v485
  %v487 = vpop.f32.mrf.mxu0
  %488 = vmatprep.mubr.f32.mxu0 0.0
  %489 = vmatmul.mubr.f32.gmra.mxu0 %v373
  %v490 = vpop.f32.mrf.mxu0
  %v491 = vadd.f32 0.0, %v490
  %v492 = vpop.f32.mrf.mxu0
  %493 = vmatprep.mubr.f32.mxu0 0.0
  %494 = vmatmul.mubr.f32.gmra.mxu0 %v376
  %v495 = vpop.f32.mrf.mxu0
  %v496 = vadd.f32 0.0, %v495
  %v497 = vpop.f32.mrf.mxu0
  %498 = vmatprep.mubr.f32.mxu0 0.0
  %499 = vmatmul.mubr.f32.gmra.mxu0 %v379
  %v500 = vpop.f32.mrf.mxu0
  %v501 = vadd.f32 0.0, %v500
  %v502 = vpop.f32.mrf.mxu0
  %503 = vmatprep.mubr.f32.mxu0 0.0
  %504 = vmatmul.mubr.f32.gmra.mxu0 %v382
  %v505 = vpop.f32.mrf.mxu0
  %v506 = vadd.f32 0.0, %v505
  %v507 = vpop.f32.mrf.mxu0
  %508 = vmatprep.mubr.f32.mxu0 0.0
  %509 = vmatmul.mubr.f32.gmra.mxu0 %v385
  %v510 = vpop.f32.mrf.mxu0
  %v511 = vadd.f32 0.0, %v510
  %v512 = vpop.f32.mrf.mxu0
  %513 = vmatprep.mubr.f32.mxu0 0.0
  %514 = vmatmul.mubr.f32.gmra.mxu0 %v388
  %v515 = vpop.f32.mrf.mxu0
  %v516 = vadd.f32 0.0, %v515
  %v517 = vpop.f32.mrf.mxu0
  %518 = vmatprep.mubr.f32.mxu0 0.0
  %519 = vmatmul.mubr.f32.gmra.mxu0 %v391
  %v520 = vpop.f32.mrf.mxu0
  %v521 = vadd.f32 0.0, %v520
  %v522 = vpop.f32.mrf.mxu0
  %523 = vmatprep.mubr.f32.mxu0 0.0
  %524 = vmatmul.mubr.f32.gmra.mxu0 %v394
  %v525 = vpop.f32.mrf.mxu0
  %v526 = vadd.f32 0.0, %v525
  %v527 = vpop.f32.mrf.mxu0
  %528 = vmatprep.mubr.f32.mxu0 0.0
  %529 = vmatmul.mubr.f32.gmra.mxu0 %v397
  %v530 = vpop.f32.mrf.mxu0
  %v531 = vadd.f32 0.0, %v530
  %v532 = vpop.f32.mrf.mxu0
  %533 = vmatprep.mubr.f32.mxu0 0.0
  %534 = vmatmul.mubr.f32.gmra.mxu0 %v400
  %v535 = vpop.f32.mrf.mxu0
  %v536 = vadd.f32 0.0, %v535
  %v537 = vpop.f32.mrf.mxu0
  %538 = vmatprep.mubr.f32.mxu0 0.0
  %539 = vmatmul.mubr.f32.gmra.mxu0 %v403
  %v540 = vpop.f32.mrf.mxu0
  %v541 = vadd.f32 0.0, %v540
  %v542 = vpop.f32.mrf.mxu0
  %543 = vmatprep.mubr.f32.mxu0 0.0
  %544 = vmatmul.mubr.f32.gmra.mxu0 %v406
  %v545 = vpop.f32.mrf.mxu0
  %v546 = vadd.f32 0.0, %v545
  %v547 = vpop.f32.mrf.mxu0
  %548 = vmatprep.mubr.f32.mxu0 0.0
  %549 = vmatmul.mubr.f32.gmra.mxu0 %v409
  %v550 = vpop.f32.mrf.mxu0
  %v551 = vadd.f32 0.0, %v550
  %v552 = vpop.f32.mrf.mxu0
  %553 = vmatprep.mubr.f32.mxu0 0.0
  %554 = vmatmul.mubr.f32.gmra.mxu0 %v412
  %v555 = vpop.f32.mrf.mxu0
  %v556 = vadd.f32 0.0, %v555
  %v557 = vpop.f32.mrf.mxu0
  %558 = vdwg.mxu0
  %v559 = vadd.f32 %v341, %v481
  %v560 = vadd.f32 %v342, %v486
  %v561 = vadd.f32 %v343, %v491
  %v562 = vadd.f32 %v344, %v496
  %v563 = vadd.f32 %v345, %v501
  %v564 = vadd.f32 %v346, %v506
  %v565 = vadd.f32 %v347, %v511
  %v566 = vadd.f32 %v348, %v516
  %v567 = vadd.f32 %v349, %v521
  %v568 = vadd.f32 %v350, %v526
  %v569 = vadd.f32 %v351, %v531
  %v570 = vadd.f32 %v352, %v536
  %v571 = vadd.f32 %v353, %v541
  %v572 = vadd.f32 %v354, %v546
  %v573 = vadd.f32 %v355, %v551
  %v574 = vadd.f32 %v356, %v556
  %575 = vst [vmem:[#allocation2] sm:$0xff] %v559
  %576 = vst [vmem:[#allocation2 + $0x8] sm:$0xff] %v560
  %577 = vst [vmem:[#allocation2 + $0x10] sm:$0xff] %v561
  %578 = vst [vmem:[#allocation2 + $0x18] sm:$0xff] %v562
  %579 = vst [vmem:[#allocation2 + $0x20] sm:$0xff] %v563
  %580 = vst [vmem:[#allocation2 + $0x28] sm:$0xff] %v564
  %581 = vst [vmem:[#allocation2 + $0x30] sm:$0xff] %v565
  %582 = vst [vmem:[#allocation2 + $0x38] sm:$0xff] %v566
  %583 = vst [vmem:[#allocation2 + $0x40] sm:$0xff] %v567
  %584 = vst [vmem:[#allocation2 + $0x48] sm:$0xff] %v568
  %585 = vst [vmem:[#allocation2 + $0x50] sm:$0xff] %v569
  %586 = vst [vmem:[#allocation2 + $0x58] sm:$0xff] %v570
  %587 = vst [vmem:[#allocation2 + $0x60] sm:$0xff] %v571
  %588 = vst [vmem:[#allocation2 + $0x68] sm:$0xff] %v572
  %589 = vst [vmem:[#allocation2 + $0x70] sm:$0xff] %v573
  %590 = vst [vmem:[#allocation2 + $0x78] sm:$0xff] %v574
  // Predicated region
  $region26: #{ffn_pallas.1} parent=0 // pred_check
    %p591 = pneg %p20
  $region27: #{ffn_pallas.1} parent=0 // pred_check_branch
    %593 = sbr.rel (%p591) target = $region29
  $region28: #{ffn_pallas.1} parent=0 // pred_region
    %v594 = vld [vmem:[#allocation2] sm:$0xff]
    %v595 = vld [vmem:[#allocation2 + $0x8] sm:$0xff]
    %v596 = vld [vmem:[#allocation2 + $0x10] sm:$0xff]
    %v597 = vld [vmem:[#allocation2 + $0x18] sm:$0xff]
    %v598 = vld [vmem:[#allocation2 + $0x20] sm:$0xff]
    %v599 = vld [vmem:[#allocation2 + $0x28] sm:$0xff]
    %v600 = vld [vmem:[#allocation2 + $0x30] sm:$0xff]
    %v601 = vld [vmem:[#allocation2 + $0x38] sm:$0xff]
    %v602 = vld [vmem:[#allocation2 + $0x40] sm:$0xff]
    %v603 = vld [vmem:[#allocation2 + $0x48] sm:$0xff]
    %v604 = vld [vmem:[#allocation2 + $0x50] sm:$0xff]
    %v605 = vld [vmem:[#allocation2 + $0x58] sm:$0xff]
    %v606 = vld [vmem:[#allocation2 + $0x60] sm:$0xff]
    %v607 = vld [vmem:[#allocation2 + $0x68] sm:$0xff]
    %v608 = vld [vmem:[#allocation2 + $0x70] sm:$0xff]
    %v609 = vld [vmem:[#allocation2 + $0x78] sm:$0xff]
    %v610 = vld [vmem:[%s4] sm:$0x1]
    %v612 = vlaneseq
    %v613 = vshrl.u32 %v612, 7
    %v614 = vsub.s32 0, %v613
    %v615 = vrot.slane %v610, %v614
    %v617 = vadd.f32 %v594, %v615
    %v618 = vadd.f32 %v595, %v615
    %v619 = vadd.f32 %v596, %v615
    %v620 = vadd.f32 %v597, %v615
    %v621 = vadd.f32 %v598, %v615
    %v622 = vadd.f32 %v599, %v615
    %v623 = vadd.f32 %v600, %v615
    %v624 = vadd.f32 %v601, %v615
    %v625 = vadd.f32 %v602, %v615
    %v626 = vadd.f32 %v603, %v615
    %v627 = vadd.f32 %v604, %v615
    %v628 = vadd.f32 %v605, %v615
    %v629 = vadd.f32 %v606, %v615
    %v630 = vadd.f32 %v607, %v615
    %v631 = vadd.f32 %v608, %v615
    %v632 = vadd.f32 %v609, %v615
    %633 = vst [vmem:[%s5] sm:$0xff] %v617
    %634 = vst [vmem:[%s5 + $0x8] sm:$0xff] %v618
    %635 = vst [vmem:[%s5 + $0x10] sm:$0xff] %v619
    %636 = vst [vmem:[%s5 + $0x18] sm:$0xff] %v620
    %637 = vst [vmem:[%s5 + $0x20] sm:$0xff] %v621
    %638 = vst [vmem:[%s5 + $0x28] sm:$0xff] %v622
    %639 = vst [vmem:[%s5 + $0x30] sm:$0xff] %v623
    %640 = vst [vmem:[%s5 + $0x38] sm:$0xff] %v624
    %641 = vst [vmem:[%s5 + $0x40] sm:$0xff] %v625
    %642 = vst [vmem:[%s5 + $0x48] sm:$0xff] %v626
    %643 = vst [vmem:[%s5 + $0x50] sm:$0xff] %v627
    %644 = vst [vmem:[%s5 + $0x58] sm:$0xff] %v628
    %645 = vst [vmem:[%s5 + $0x60] sm:$0xff] %v629
    %646 = vst [vmem:[%s5 + $0x68] sm:$0xff] %v630
    %647 = vst [vmem:[%s5 + $0x70] sm:$0xff] %v631
    %648 = vst [vmem:[%s5 + $0x78] sm:$0xff] %v632
  $region29: #{ffn_pallas.1} parent=0 // pred_fallthru
    _
  // Predicated region
  $region30: #{ffn_pallas.1} parent=0 // pred_check
    _
  $region31: #{ffn_pallas.1} parent=0 // pred_check_branch
    %650 = sbr.rel (0) target = $region33
  $region32: #{ffn_pallas.1} parent=0 // pred_region
    _
  $region33: #{ffn_pallas.1} parent=0 // pred_fallthru
    _
  // Predicated region
  $region34: #{ffn_pallas.1} parent=0 // pred_check
    _
  $region35: #{ffn_pallas.1} parent=0 // pred_check_branch
    %652 = sbr.rel (0) target = $region37
  $region36: #{ffn_pallas.1} parent=0 // pred_region
    _
  $region37: #{ffn_pallas.1} parent=0 // pred_fallthru
    _

</llo_original>
